<compile_context>
chip_gen: v5e
topology: v5e:2x2
jax: 0.10.0
libtpu: 0.0.40
codegen_flags: <defaults>
</compile_context>

<pallas_src>
import jax
import jax.numpy as jnp
from jax.experimental import pallas as pl
from jax.experimental.pallas import tpu as pltpu


def _round_up(x, m):
    return ((x + m - 1) // m) * m


def _pick_tile(size, unit, max_tile):
    """Largest tile (multiple of `unit`, <= max_tile) with small padding waste.

    Returns (tile, padded_size) with tile dividing padded_size and
    padded_size % unit == 0.  Waste is capped at ~12.5% of the minimally padded
    size (the t == unit fallback always has zero extra waste).
    """
    size_u = _round_up(size, unit)
    max_tile = max(unit, (max_tile // unit) * unit)
    if size_u <= max_tile:
        return size_u, size_u
    waste_budget = max(size_u // 8, unit)
    for t in range(max_tile, unit - 1, -unit):       # prefer the largest acceptable tile
        pad = _round_up(size, t)
        if pad - size_u <= waste_budget:
            return t, pad
    return unit, size_u                               # unreachable (t == unit always fits)


def _optical_kernel(wgtp_ref, vtx_ref, tab_ref, out_ref):
    # vtx_ref : (TB, 8)   [vx, vy, vz, |v|^2, 1, 0, 0, 0]
    # tab_ref : (24, TN)  packed per-PMT table (see wrapper)
    wgtP = wgtp_ref[0]
    lhs = vtx_ref[...]

    # MXU: dr2 = |v - p|^2 and dot = (v - p).dir as two K=8 f32 matmuls.
    dr2 = jnp.dot(lhs, tab_ref[0:8, :],
                  preferred_element_type=jnp.float32,
                  precision=jax.lax.Precision.HIGHEST)
    dot = jnp.dot(lhs, tab_ref[8:16, :],
                  preferred_element_type=jnp.float32,
                  precision=jax.lax.Precision.HIGHEST)

    dr2 = jnp.maximum(dr2, 1e-12)          # guard the expanded form against round-off
    inv_dr2 = 1.0 / dr2                    # single exact divide
    dr = jnp.sqrt(dr2)                     # EUP
    inv_dr = dr * inv_dr2                  # 1/dr without a second divide

    dimm_dist = inv_dr2 * jnp.exp(dr * wgtP)   # sigmoid(wgtN) pre-folded into rows 16-18
    cosT1 = dot * inv_dr

    # order-3 angular model, Horner form on the sigmoid(wgtN)-scaled coefficients
    dimm_angl = tab_ref[16:17, :] + cosT1 * (tab_ref[17:18, :] + cosT1 * tab_ref[18:19, :])

    out_ref[...] = dimm_angl * dimm_dist


def classic_optical_model(pmt_q, pmt_t, pmt_pos, pmt_dir, vtxPos,
                          wgtN, wgtP, wgtC, *, tn=1024, tb=256):
    """Pallas implementation of ClassicOpticalModel.forward (pmt_q/pmt_t only set the shape)."""
    B, N = pmt_q.shape
    f32 = jnp.float32

    TN, N_pad = _pick_tile(N, 128, tn)     # lanes   (PMT index)
    TB, B_pad = _pick_tile(B, 8, tb)       # sublanes (event index)
    # v7x has two TensorCores: make sure at least one parallel axis has >= 2 steps.
    if (N_pad // TN) * (B_pad // TB) == 1:
        if TN % 256 == 0:
            TN //= 2
        elif TB % 16 == 0:
            TB //= 2

    pos = pmt_pos.astype(f32)              # (N, 3)
    drn = pmt_dir.astype(f32)              # (N, 3)
    sigN = jax.nn.sigmoid(wgtN.astype(f32)).reshape(())

    # Packed per-PMT table (24 rows = 3 full sublane tiles).
    # Padded PMT columns are all-zero except row 4 = 1  ->  dr2 = 1, dot = 0,
    # coefficients = 0: padded outputs are exactly 0 and finite for any wgtP.
    tab = jnp.zeros((24, N_pad), f32)
    tab = tab.at[0:3, :N].set(-2.0 * pos.T)                       # -2*pos
    tab = tab.at[3, :N].set(1.0)                                  # pairs with |v|^2
    tab = tab.at[4, :N].set(jnp.sum(pos * pos, axis=-1))          # |pos|^2
    tab = tab.at[4, N:].set(1.0)                                  # padded cols: dr2 = 1
    tab = tab.at[8:11, :N].set(drn.T)                             # dir
    tab = tab.at[12, :N].set(-jnp.sum(pos * drn, axis=-1))        # -pos.dir
    tab = tab.at[16:19, :N].set(sigN * wgtC.astype(f32).T)        # sigmoid(wgtN)*wgtC^T

    # Per-event LHS rows: [vx, vy, vz, |v|^2, 1, 0, 0, 0] (padded events: [0,0,0,0,1,...]).
    vtx = vtxPos.astype(f32)
    lhs = jnp.zeros((B_pad, 8), f32)
    lhs = lhs.at[:B, 0:3].set(vtx)
    lhs = lhs.at[:B, 3].set(jnp.sum(vtx * vtx, axis=-1))
    lhs = lhs.at[:, 4].set(1.0)

    wgtp = wgtP.astype(f32).reshape(1)

    out = pl.pallas_call(
        _optical_kernel,
        out_shape=jax.ShapeDtypeStruct((B_pad, N_pad), f32),
        grid_spec=pltpu.PrefetchScalarGridSpec(
            num_scalar_prefetch=0,
            # PMT tiles outer, batch tiles inner: the (24, TN) table block index is
            # constant along the inner axis, so it is not re-streamed per batch tile.
            grid=(N_pad // TN, B_pad // TB),
            in_specs=[
                pl.BlockSpec(memory_space=pltpu.MemorySpace.SMEM),   # [wgtP]
                pl.BlockSpec((TB, 8), lambda j, i: (i, 0)),          # per-event LHS tile
                pl.BlockSpec((24, TN), lambda j, i: (0, j)),         # packed per-PMT table
            ],
            out_specs=pl.BlockSpec((TB, TN), lambda j, i: (i, j)),
        ),
        compiler_params=pltpu.CompilerParams(
            dimension_semantics=("parallel", "parallel"),
            vmem_limit_bytes=32 * 1024 * 1024,
        ),
    )(wgtp, lhs, tab)

    if B_pad == B and N_pad == N:
        return out                          # no padding -> skip the trailing copy
    return out[:B, :N]


def _reference(pmt_q, pmt_t, pmt_pos, pmt_dir, vtxPos, wgtN, wgtP, wgtC):
    """Pure-JAX transcription of the PyTorch forward, for verification."""
    dxyz = vtxPos[:, None, :] - pmt_pos[None, :, :]
    dr2 = (dxyz ** 2).sum(-1)
    dr = jnp.sqrt(dr2) + 1e-9
    dimm_dist = jax.nn.sigmoid(wgtN) / dr2 * jnp.exp(dr * wgtP.reshape(1, 1))
    dxyz = dxyz / dr[..., None]
    cosT1 = (dxyz * pmt_dir[None, :, :]).sum(-1)
    cosTs = jnp.stack([jnp.ones_like(cosT1), cosT1, cosT1 ** 2], axis=-1)
    dimm_angl = (cosTs * wgtC[None]).sum(-1)
    return dimm_angl * dimm_dist


if __name__ == "__main__":
    opt_order = 3
    # (tile-aligned, padded, multi-lane-tile) configs exercise the tiling/padding paths.
    for batch, pmt_N in [(4, 128), (5, 200), (6, 1500)]:
        key = jax.random.PRNGKey(0)
        k1, k2, k3, k4, k5, k6, k7 = jax.random.split(key, 7)

        # parameters (shapes from __init__: wgtN (1,), wgtP (1,), wgtC (N, 3))
        wgtN = jax.random.normal(k1, (1,), jnp.float32)
        wgtP = -jnp.abs(jax.random.normal(k2, (1,), jnp.float32)) * 0.05  # attenuation < 0
        wgtC = jax.random.normal(k3, (pmt_N, opt_order), jnp.float32)

        # inputs: detector-like geometry (PMTs on a radius-10 shell facing inward,
        # vertices well inside), which keeps dr2 away from 0 as in the real detector.
        pmt_q = jax.random.normal(k4, (batch, pmt_N), jnp.float32)   # only shape is used
        pmt_t = jax.random.normal(k5, (batch, pmt_N), jnp.float32)   # unused by forward
        u = jax.random.normal(k6, (pmt_N, 3), jnp.float32)
        u = u / jnp.linalg.norm(u, axis=-1, keepdims=True)
        pmt_pos = 10.0 * u
        pmt_dir = -u
        vtxPos = jax.random.normal(k7, (batch, 3), jnp.float32)

        out = classic_optical_model(pmt_q, pmt_t, pmt_pos, pmt_dir, vtxPos,
                                    wgtN, wgtP, wgtC)
        out = jax.block_until_ready(out)

        ref = _reference(pmt_q, pmt_t, pmt_pos, pmt_dir, vtxPos, wgtN, wgtP, wgtC)
        assert out.shape == (batch, pmt_N) and out.dtype == jnp.float32
        err = float(jnp.max(jnp.abs(out - ref)))
        assert jnp.allclose(out, ref, rtol=1e-5, atol=1e-5), (
            f"config ({batch},{pmt_N}): max abs err = {err}")

    print("KERNEL_OK")
</pallas_src>

<mosaic_0001>
module attributes {stable_mosaic.version = 11 : i64} {
  func.func @_optical_kernel(%arg0: i32, %arg1: i32, %arg2: memref<1xf32, #tpu.memory_space<smem>>, %arg3: memref<8x8xf32, #tpu.memory_space<vmem>>, %arg4: memref<24x128xf32, #tpu.memory_space<vmem>>, %arg5: memref<8x128xf32, #tpu.memory_space<vmem>>) attributes {dimension_semantics = [#tpu.dimension_semantics<parallel>, #tpu.dimension_semantics<parallel>], iteration_bounds = array<i64: 1, 1>, scalar_prefetch = 0 : i64, scratch_operands = 0 : i64, tpu.core_type = #tpu.core_type<tc>, window_params = [{transform_indices = @transform_0, window_bounds = array<i64: 1>}, {transform_indices = @transform_1, window_bounds = array<i64: 8, 8>}, {transform_indices = @transform_2, window_bounds = array<i64: 24, 128>}, {transform_indices = @transform_3, window_bounds = array<i64: 8, 128>}]} {
    %c0 = arith.constant 0 : index
    %0 = memref.load %arg2[%c0] : memref<1xf32, #tpu.memory_space<smem>>
    %c0_0 = arith.constant 0 : index
    %c0_1 = arith.constant 0 : index
    %1 = vector.load %arg3[%c0_0, %c0_1] : memref<8x8xf32, #tpu.memory_space<vmem>>, vector<8x8xf32>
    %c0_2 = arith.constant 0 : index
    %c0_3 = arith.constant 0 : index
    %2 = vector.load %arg4[%c0_2, %c0_3] : memref<24x128xf32, #tpu.memory_space<vmem>>, vector<8x128xf32>
    %cst = arith.constant dense<0.000000e+00> : vector<8x128xf32>
    %3 = tpu.matmul %1, %2, %cst {dimension_numbers = #tpu.dot_dimension_numbers<[1], [0], [0], [1], [0, 0, 1, 1], [], []>, precision = #tpu.contract_precision<fp32>} : vector<8x8xf32>, vector<8x128xf32>, vector<8x128xf32> -> vector<8x128xf32>
    %c8 = arith.constant 8 : index
    %c0_4 = arith.constant 0 : index
    %4 = vector.load %arg4[%c8, %c0_4] : memref<24x128xf32, #tpu.memory_space<vmem>>, vector<8x128xf32>
    %cst_5 = arith.constant dense<0.000000e+00> : vector<8x128xf32>
    %5 = tpu.matmul %1, %4, %cst_5 {dimension_numbers = #tpu.dot_dimension_numbers<[1], [0], [0], [1], [0, 0, 1, 1], [], []>, precision = #tpu.contract_precision<fp32>} : vector<8x8xf32>, vector<8x128xf32>, vector<8x128xf32> -> vector<8x128xf32>
    %cst_6 = arith.constant 9.99999996E-13 : f32
    %6 = vector.broadcast %cst_6 : f32 to vector<8x128xf32>
    %7 = arith.maximumf %3, %6 : vector<8x128xf32>
    %cst_7 = arith.constant 1.000000e+00 : f32
    %8 = vector.broadcast %cst_7 : f32 to vector<8x128xf32>
    %9 = arith.divf %8, %7 : vector<8x128xf32>
    %10 = math.sqrt %7 : vector<8x128xf32>
    %11 = arith.mulf %10, %9 : vector<8x128xf32>
    %12 = vector.broadcast %0 : f32 to vector<8x128xf32>
    %13 = arith.mulf %10, %12 : vector<8x128xf32>
    %14 = math.exp %13 : vector<8x128xf32>
    %15 = arith.mulf %9, %14 : vector<8x128xf32>
    %16 = arith.mulf %5, %11 : vector<8x128xf32>
    %c16 = arith.constant 16 : index
    %c0_8 = arith.constant 0 : index
    %17 = vector.load %arg4[%c16, %c0_8] : memref<24x128xf32, #tpu.memory_space<vmem>>, vector<1x128xf32>
    %c17 = arith.constant 17 : index
    %c0_9 = arith.constant 0 : index
    %18 = vector.load %arg4[%c17, %c0_9] : memref<24x128xf32, #tpu.memory_space<vmem>>, vector<1x128xf32>
    %c18 = arith.constant 18 : index
    %c0_10 = arith.constant 0 : index
    %19 = vector.load %arg4[%c18, %c0_10] : memref<24x128xf32, #tpu.memory_space<vmem>>, vector<1x128xf32>
    %20 = vector.broadcast %19 : vector<1x128xf32> to vector<8x128xf32>
    %21 = arith.mulf %16, %20 : vector<8x128xf32>
    %22 = vector.broadcast %18 : vector<1x128xf32> to vector<8x128xf32>
    %23 = arith.addf %22, %21 : vector<8x128xf32>
    %24 = arith.mulf %16, %23 : vector<8x128xf32>
    %25 = vector.broadcast %17 : vector<1x128xf32> to vector<8x128xf32>
    %26 = arith.addf %25, %24 : vector<8x128xf32>
    %27 = arith.mulf %26, %15 : vector<8x128xf32>
    %c0_11 = arith.constant 0 : index
    %c0_12 = arith.constant 0 : index
    %28 = vector.load %arg5[%c0_11, %c0_12] : memref<8x128xf32, #tpu.memory_space<vmem>>, vector<8x128xf32>
    tpu.vector_store %arg5[%c0_11, %c0_12], %27 {strides = array<i32>} : memref<8x128xf32, #tpu.memory_space<vmem>>, vector<8x128xf32>,
    return
  }
  func.func @transform_0(%arg0: i32, %arg1: i32) -> i32 {
    %c0_i32 = arith.constant 0 : i32
    %c0_i32_0 = arith.constant 0 : i32
    return %c0_i32 : i32
  }
  func.func @transform_1(%arg0: i32, %arg1: i32) -> (i32, i32) {
    %c0_i32 = arith.constant 0 : i32
    %c0_i32_0 = arith.constant 0 : i32
    return %arg1, %c0_i32 : i32, i32
  }
  func.func @transform_2(%arg0: i32, %arg1: i32) -> (i32, i32) {
    %c0_i32 = arith.constant 0 : i32
    %c0_i32_0 = arith.constant 0 : i32
    return %c0_i32, %arg0 : i32, i32
  }
  func.func @transform_3(%arg0: i32, %arg1: i32) -> (i32, i32) {
    %c0_i32 = arith.constant 0 : i32
    return %arg1, %arg0 : i32, i32
  }
}

</mosaic_0001>

<llo_original>
// kernel: tpu_custom_call.1
$region0: #{tpu_custom_call.1}
  #allocation0 [shape = 'u32[]', space=smem, size = 0x4, offset = 0x4, fixed_abs, tag = 'smem constant byte address 0x4 - core index']
  #allocation1 [shape = 'u32[72,128]{1,0:T(1,128)}', space=vmem, size = 0x9000, scoped, tag = 'internal scratch']
  #allocation2 [shape = 'f32[1]{0:T(128)S(6)}', space=smem, size = 0x200, scoped, tag = 'scoped memory for tpu_custom_call.1']
  %s0 = inlined_call_operand.<no memory space> [shape: f32[1], index: 0, kind: input, shape index: {}]
  %s1 = inlined_call_operand.hbm [shape: f32[8,8], index: 1, kind: input, shape index: {}]
  %s2 = inlined_call_operand.hbm [shape: f32[24,128], index: 2, kind: input, shape index: {}]
  %s3 = inlined_call_operand.hbm [shape: f32[8,128], index: 3, kind: output, shape index: {}]
  %s4 = sld [smem:[#allocation0]]
  $region30: #{tpu_custom_call.1} parent=0
    _
  %s6 = ssub.s32 1, %s4
  %s7 = scalar_select 0, %s6, %s4
  %8 = sst [smem:[#allocation2]] %s0
  $region1: #{tpu_custom_call.1} parent=0
    #allocation3 [shape = 'u8[4096]{0}', space=vmem, size = 0x1000, scoped, tag = 'input window, operand 1, single buffered']
    #allocation4 [shape = 's32[1]{0}', space=sflag, size = 0x4, scoped, tag = 'scoped memory for tpu_custom_call.1']
    #allocation5 [shape = 's32[1]{0}', space=sflag, size = 0x4, scoped, tag = 'scoped memory for tpu_custom_call.1']
    #allocation6 [shape = 'u8[12288]{0}', space=vmem, size = 0x3000, scoped, tag = 'input window, operand 2, single buffered']
    #allocation7 [shape = 's32[1]{0}', space=sflag, size = 0x4, scoped, tag = 'scoped memory for tpu_custom_call.1']
    #allocation8 [shape = 'u8[4096]{0}', space=vmem, size = 0x1000, scoped, tag = 'output window, operand 0, single buffered']
    %9 = vsyncpa [#allocation4], 0
    %10 = vsyncpa [#allocation7], 0
    %11 = vsyncpa [#allocation5], 0
    // Predicated region
    $region2: #{tpu_custom_call.1} parent=1 // pred_check
      _
    $region3: #{tpu_custom_call.1} parent=1 // pred_check_branch
      %13 = sbr.rel (0) target = $region5
    $region4: #{tpu_custom_call.1} parent=1 // pred_region
      _
    $region5: #{tpu_custom_call.1} parent=1 // pred_fallthru
      _
    // Predicated region
    $region6: #{tpu_custom_call.1} parent=1 // pred_check
      _
    $region7: #{tpu_custom_call.1} parent=1 // pred_check_branch
      %15 = sbr.rel (0) target = $region9
    $region8: #{tpu_custom_call.1} parent=1 // pred_region
      %17 = vsyncadd [#allocation4], 0
      %s19 = sshll.u32 %s1, 4
      %s20 = int_to_ptr.hbm [resolvable:$true] %s19
      %s21 = sshll.u32 [#allocation3], 4
      %s22 = int_to_ptr.vmem [resolvable:$true] %s21
      %24 = dma.hbm_to_vmem [thread:$0]  %s20, 128, %s22, [#allocation4]
    $region9: #{tpu_custom_call.1} parent=1 // pred_fallthru
      _
    // Predicated region
    $region10: #{tpu_custom_call.1} parent=1 // pred_check
      _
    $region11: #{tpu_custom_call.1} parent=1 // pred_check_branch
      %26 = sbr.rel (0) target = $region13
    $region12: #{tpu_custom_call.1} parent=1 // pred_region
      %28 = vsyncadd [#allocation7], 0
      %s29 = sshll.u32 %s2, 4
      %s30 = int_to_ptr.hbm [resolvable:$true] %s29
      %s31 = sshll.u32 [#allocation6], 4
      %s32 = int_to_ptr.vmem [resolvable:$true] %s31
      %37 = dma.hbm_to_vmem [thread:$0]  %s30, 384, %s32, [#allocation7], 128, 128, 8
    $region13: #{tpu_custom_call.1} parent=1 // pred_fallthru
      _
    // Predicated region
    $region14: #{tpu_custom_call.1} parent=1 // pred_check
      _
    $region15: #{tpu_custom_call.1} parent=1 // pred_check_branch
      %39 = sbr.rel (0) target = $region17
    $region16: #{tpu_custom_call.1} parent=1 // pred_region
      %41 = dma.done [#allocation4], 128
    $region17: #{tpu_custom_call.1} parent=1 // pred_fallthru
      _
    // Predicated region
    $region18: #{tpu_custom_call.1} parent=1 // pred_check
      _
    $region19: #{tpu_custom_call.1} parent=1 // pred_check_branch
      %43 = sbr.rel (0) target = $region21
    $region20: #{tpu_custom_call.1} parent=1 // pred_region
      %45 = dma.done [#allocation7], 384
    $region21: #{tpu_custom_call.1} parent=1 // pred_fallthru
      _
    %s46 = sld [smem:[#allocation2]]
    %v47 = vld [vmem:[#allocation3] sm:$0xff]
    %v48 = vld [vmem:[#allocation6] sm:$0xff]
    %vm49 = vcmask 64512
    %v51 = vsel %vm49, %v47, 0
    %53 = vmatpush.msra.mxu0 0.0
    %54 = vmatpush.msra.mxu0 0.0
    %55 = vmatpush.msra.mxu0 0.0
    %56 = vmatpush.msra.mxu0 0.0
    %57 = vmatpush.msra.mxu0 0.0
    %58 = vmatpush.msra.mxu0 0.0
    %59 = vmatpush.msra.mxu0 0.0
    %60 = vmatpush.msra.mxu0 0.0
    %61 = vmatpush.msra.mxu0 0.0
    %62 = vmatpush.msra.mxu0 0.0
    %63 = vmatpush.msra.mxu0 0.0
    %64 = vmatpush.msra.mxu0 0.0
    %65 = vmatpush.msra.mxu0 0.0
    %66 = vmatpush.msra.mxu0 0.0
    %67 = vmatpush.msra.mxu0 0.0
    %v68 = vand.u32 %v48, 4294901760
    %69 = vmatpush.msra.mxu0 %v68
    %v70 = vand.u32 %v51, 4294901760
    %v71 = vsub.f32 %v51, %v70
    %v72 = vand.u32 %v71, 4294901760
    %v73 = vsub.f32 %v71, %v72
    %v74 = vand.u32 %v73, 4294901760
    %75 = vmatmul.f32.gmra.mxu0 %v74
    %v76 = vpop.f32.mrf.mxu0
    %v77 = vadd.f32 0.0, %v76
    %78 = vdwg.mxu0
    %79 = vmatpush.msra.mxu0 0.0
    %80 = vmatpush.msra.mxu0 0.0
    %81 = vmatpush.msra.mxu0 0.0
    %82 = vmatpush.msra.mxu0 0.0
    %83 = vmatpush.msra.mxu0 0.0
    %84 = vmatpush.msra.mxu0 0.0
    %85 = vmatpush.msra.mxu0 0.0
    %86 = vmatpush.msra.mxu0 0.0
    %87 = vmatpush.msra.mxu0 0.0
    %88 = vmatpush.msra.mxu0 0.0
    %89 = vmatpush.msra.mxu0 0.0
    %90 = vmatpush.msra.mxu0 0.0
    %91 = vmatpush.msra.mxu0 0.0
    %92 = vmatpush.msra.mxu0 0.0
    %93 = vmatpush.msra.mxu0 0.0
    %v94 = vand.u32 %v48, 4294901760
    %v95 = vsub.f32 %v48, %v94
    %v96 = vand.u32 %v95, 4294901760
    %v97 = vsub.f32 %v95, %v96
    %v98 = vand.u32 %v97, 4294901760
    %99 = vmatpush.msra.mxu0 %v98
    %v100 = vand.u32 %v51, 4294901760
    %101 = vmatmul.f32.gmra.mxu0 %v100
    %v102 = vpop.f32.mrf.mxu0
    %v103 = vadd.f32 %v77, %v102
    %104 = vdwg.mxu0
    %105 = vmatpush.msra.mxu0 0.0
    %106 = vmatpush.msra.mxu0 0.0
    %107 = vmatpush.msra.mxu0 0.0
    %108 = vmatpush.msra.mxu0 0.0
    %109 = vmatpush.msra.mxu0 0.0
    %110 = vmatpush.msra.mxu0 0.0
    %111 = vmatpush.msra.mxu0 0.0
    %112 = vmatpush.msra.mxu0 0.0
    %113 = vmatpush.msra.mxu0 0.0
    %114 = vmatpush.msra.mxu0 0.0
    %115 = vmatpush.msra.mxu0 0.0
    %116 = vmatpush.msra.mxu0 0.0
    %117 = vmatpush.msra.mxu0 0.0
    %118 = vmatpush.msra.mxu0 0.0
    %119 = vmatpush.msra.mxu0 0.0
    %v120 = vand.u32 %v48, 4294901760
    %v121 = vsub.f32 %v48, %v120
    %122 = vmatpush.msra.mxu0 %v121
    %v123 = vand.u32 %v51, 4294901760
    %v124 = vsub.f32 %v51, %v123
    %125 = vmatmul.f32.gmra.mxu0 %v124
    %v126 = vpop.f32.mrf.mxu0
    %v127 = vadd.f32 %v103, %v126
    %128 = vdwg.mxu0
    %129 = vmatpush.msra.mxu0 0.0
    %130 = vmatpush.msra.mxu0 0.0
    %131 = vmatpush.msra.mxu0 0.0
    %132 = vmatpush.msra.mxu0 0.0
    %133 = vmatpush.msra.mxu0 0.0
    %134 = vmatpush.msra.mxu0 0.0
    %135 = vmatpush.msra.mxu0 0.0
    %136 = vmatpush.msra.mxu0 0.0
    %137 = vmatpush.msra.mxu0 0.0
    %138 = vmatpush.msra.mxu0 0.0
    %139 = vmatpush.msra.mxu0 0.0
    %140 = vmatpush.msra.mxu0 0.0
    %141 = vmatpush.msra.mxu0 0.0
    %142 = vmatpush.msra.mxu0 0.0
    %143 = vmatpush.msra.mxu0 0.0
    %v144 = vand.u32 %v48, 4294901760
    %145 = vmatpush.msra.mxu0 %v144
    %v146 = vand.u32 %v51, 4294901760
    %v147 = vsub.f32 %v51, %v146
    %v148 = vand.u32 %v147, 4294901760
    %149 = vmatmul.f32.gmra.mxu0 %v148
    %v150 = vpop.f32.mrf.mxu0
    %v151 = vadd.f32 %v127, %v150
    %152 = vdwg.mxu0
    %153 = vmatpush.msra.mxu0 0.0
    %154 = vmatpush.msra.mxu0 0.0
    %155 = vmatpush.msra.mxu0 0.0
    %156 = vmatpush.msra.mxu0 0.0
    %157 = vmatpush.msra.mxu0 0.0
    %158 = vmatpush.msra.mxu0 0.0
    %159 = vmatpush.msra.mxu0 0.0
    %160 = vmatpush.msra.mxu0 0.0
    %161 = vmatpush.msra.mxu0 0.0
    %162 = vmatpush.msra.mxu0 0.0
    %163 = vmatpush.msra.mxu0 0.0
    %164 = vmatpush.msra.mxu0 0.0
    %165 = vmatpush.msra.mxu0 0.0
    %166 = vmatpush.msra.mxu0 0.0
    %167 = vmatpush.msra.mxu0 0.0
    %v168 = vand.u32 %v48, 4294901760
    %v169 = vsub.f32 %v48, %v168
    %v170 = vand.u32 %v169, 4294901760
    %171 = vmatpush.msra.mxu0 %v170
    %v172 = vand.u32 %v51, 4294901760
    %173 = vmatmul.f32.gmra.mxu0 %v172
    %v174 = vpop.f32.mrf.mxu0
    %v175 = vadd.f32 %v151, %v174
    %176 = vdwg.mxu0
    %177 = vmatpush.msra.mxu0 0.0
    %178 = vmatpush.msra.mxu0 0.0
    %179 = vmatpush.msra.mxu0 0.0
    %180 = vmatpush.msra.mxu0 0.0
    %181 = vmatpush.msra.mxu0 0.0
    %182 = vmatpush.msra.mxu0 0.0
    %183 = vmatpush.msra.mxu0 0.0
    %184 = vmatpush.msra.mxu0 0.0
    %185 = vmatpush.msra.mxu0 0.0
    %186 = vmatpush.msra.mxu0 0.0
    %187 = vmatpush.msra.mxu0 0.0
    %188 = vmatpush.msra.mxu0 0.0
    %189 = vmatpush.msra.mxu0 0.0
    %190 = vmatpush.msra.mxu0 0.0
    %191 = vmatpush.msra.mxu0 0.0
    %v192 = vand.u32 %v48, 4294901760
    %193 = vmatpush.msra.mxu0 %v192
    %v194 = vand.u32 %v51, 4294901760
    %195 = vmatmul.f32.gmra.mxu0 %v194
    %v196 = vpop.f32.mrf.mxu0
    %v197 = vadd.f32 %v175, %v196
    %198 = vdwg.mxu0
    %v199 = vld [vmem:[#allocation6 + $0x8] sm:$0xff]
    %200 = vmatpush.msra.mxu0 0.0
    %201 = vmatpush.msra.mxu0 0.0
    %202 = vmatpush.msra.mxu0 0.0
    %203 = vmatpush.msra.mxu0 0.0
    %204 = vmatpush.msra.mxu0 0.0
    %205 = vmatpush.msra.mxu0 0.0
    %206 = vmatpush.msra.mxu0 0.0
    %207 = vmatpush.msra.mxu0 0.0
    %208 = vmatpush.msra.mxu0 0.0
    %209 = vmatpush.msra.mxu0 0.0
    %210 = vmatpush.msra.mxu0 0.0
    %211 = vmatpush.msra.mxu0 0.0
    %212 = vmatpush.msra.mxu0 0.0
    %213 = vmatpush.msra.mxu0 0.0
    %214 = vmatpush.msra.mxu0 0.0
    %v215 = vand.u32 %v199, 4294901760
    %216 = vmatpush.msra.mxu0 %v215
    %v217 = vand.u32 %v51, 4294901760
    %v218 = vsub.f32 %v51, %v217
    %v219 = vand.u32 %v218, 4294901760
    %v220 = vsub.f32 %v218, %v219
    %v221 = vand.u32 %v220, 4294901760
    %222 = vmatmul.f32.gmra.mxu0 %v221
    %v223 = vpop.f32.mrf.mxu0
    %v224 = vadd.f32 0.0, %v223
    %225 = vdwg.mxu0
    %226 = vmatpush.msra.mxu0 0.0
    %227 = vmatpush.msra.mxu0 0.0
    %228 = vmatpush.msra.mxu0 0.0
    %229 = vmatpush.msra.mxu0 0.0
    %230 = vmatpush.msra.mxu0 0.0
    %231 = vmatpush.msra.mxu0 0.0
    %232 = vmatpush.msra.mxu0 0.0
    %233 = vmatpush.msra.mxu0 0.0
    %234 = vmatpush.msra.mxu0 0.0
    %235 = vmatpush.msra.mxu0 0.0
    %236 = vmatpush.msra.mxu0 0.0
    %237 = vmatpush.msra.mxu0 0.0
    %238 = vmatpush.msra.mxu0 0.0
    %239 = vmatpush.msra.mxu0 0.0
    %240 = vmatpush.msra.mxu0 0.0
    %v241 = vand.u32 %v199, 4294901760
    %v242 = vsub.f32 %v199, %v241
    %v243 = vand.u32 %v242, 4294901760
    %v244 = vsub.f32 %v242, %v243
    %v245 = vand.u32 %v244, 4294901760
    %246 = vmatpush.msra.mxu0 %v245
    %v247 = vand.u32 %v51, 4294901760
    %248 = vmatmul.f32.gmra.mxu0 %v247
    %v249 = vpop.f32.mrf.mxu0
    %v250 = vadd.f32 %v224, %v249
    %251 = vdwg.mxu0
    %252 = vmatpush.msra.mxu0 0.0
    %253 = vmatpush.msra.mxu0 0.0
    %254 = vmatpush.msra.mxu0 0.0
    %255 = vmatpush.msra.mxu0 0.0
    %256 = vmatpush.msra.mxu0 0.0
    %257 = vmatpush.msra.mxu0 0.0
    %258 = vmatpush.msra.mxu0 0.0
    %259 = vmatpush.msra.mxu0 0.0
    %260 = vmatpush.msra.mxu0 0.0
    %261 = vmatpush.msra.mxu0 0.0
    %262 = vmatpush.msra.mxu0 0.0
    %263 = vmatpush.msra.mxu0 0.0
    %264 = vmatpush.msra.mxu0 0.0
    %265 = vmatpush.msra.mxu0 0.0
    %266 = vmatpush.msra.mxu0 0.0
    %v267 = vand.u32 %v199, 4294901760
    %v268 = vsub.f32 %v199, %v267
    %269 = vmatpush.msra.mxu0 %v268
    %v270 = vand.u32 %v51, 4294901760
    %v271 = vsub.f32 %v51, %v270
    %272 = vmatmul.f32.gmra.mxu0 %v271
    %v273 = vpop.f32.mrf.mxu0
    %v274 = vadd.f32 %v250, %v273
    %275 = vdwg.mxu0
    %276 = vmatpush.msra.mxu0 0.0
    %277 = vmatpush.msra.mxu0 0.0
    %278 = vmatpush.msra.mxu0 0.0
    %279 = vmatpush.msra.mxu0 0.0
    %280 = vmatpush.msra.mxu0 0.0
    %281 = vmatpush.msra.mxu0 0.0
    %282 = vmatpush.msra.mxu0 0.0
    %283 = vmatpush.msra.mxu0 0.0
    %284 = vmatpush.msra.mxu0 0.0
    %285 = vmatpush.msra.mxu0 0.0
    %286 = vmatpush.msra.mxu0 0.0
    %287 = vmatpush.msra.mxu0 0.0
    %288 = vmatpush.msra.mxu0 0.0
    %289 = vmatpush.msra.mxu0 0.0
    %290 = vmatpush.msra.mxu0 0.0
    %v291 = vand.u32 %v199, 4294901760
    %292 = vmatpush.msra.mxu0 %v291
    %v293 = vand.u32 %v51, 4294901760
    %v294 = vsub.f32 %v51, %v293
    %v295 = vand.u32 %v294, 4294901760
    %296 = vmatmul.f32.gmra.mxu0 %v295
    %v297 = vpop.f32.mrf.mxu0
    %v298 = vadd.f32 %v274, %v297
    %299 = vdwg.mxu0
    %300 = vmatpush.msra.mxu0 0.0
    %301 = vmatpush.msra.mxu0 0.0
    %302 = vmatpush.msra.mxu0 0.0
    %303 = vmatpush.msra.mxu0 0.0
    %304 = vmatpush.msra.mxu0 0.0
    %305 = vmatpush.msra.mxu0 0.0
    %306 = vmatpush.msra.mxu0 0.0
    %307 = vmatpush.msra.mxu0 0.0
    %308 = vmatpush.msra.mxu0 0.0
    %309 = vmatpush.msra.mxu0 0.0
    %310 = vmatpush.msra.mxu0 0.0
    %311 = vmatpush.msra.mxu0 0.0
    %312 = vmatpush.msra.mxu0 0.0
    %313 = vmatpush.msra.mxu0 0.0
    %314 = vmatpush.msra.mxu0 0.0
    %v315 = vand.u32 %v199, 4294901760
    %v316 = vsub.f32 %v199, %v315
    %v317 = vand.u32 %v316, 4294901760
    %318 = vmatpush.msra.mxu0 %v317
    %v319 = vand.u32 %v51, 4294901760
    %320 = vmatmul.f32.gmra.mxu0 %v319
    %v321 = vpop.f32.mrf.mxu0
    %v322 = vadd.f32 %v298, %v321
    %323 = vdwg.mxu0
    %324 = vmatpush.msra.mxu0 0.0
    %325 = vmatpush.msra.mxu0 0.0
    %326 = vmatpush.msra.mxu0 0.0
    %327 = vmatpush.msra.mxu0 0.0
    %328 = vmatpush.msra.mxu0 0.0
    %329 = vmatpush.msra.mxu0 0.0
    %330 = vmatpush.msra.mxu0 0.0
    %331 = vmatpush.msra.mxu0 0.0
    %332 = vmatpush.msra.mxu0 0.0
    %333 = vmatpush.msra.mxu0 0.0
    %334 = vmatpush.msra.mxu0 0.0
    %335 = vmatpush.msra.mxu0 0.0
    %336 = vmatpush.msra.mxu0 0.0
    %337 = vmatpush.msra.mxu0 0.0
    %338 = vmatpush.msra.mxu0 0.0
    %v339 = vand.u32 %v199, 4294901760
    %340 = vmatpush.msra.mxu0 %v339
    %v341 = vand.u32 %v51, 4294901760
    %342 = vmatmul.f32.gmra.mxu0 %v341
    %v343 = vpop.f32.mrf.mxu0
    %v344 = vadd.f32 %v322, %v343
    %345 = vdwg.mxu0
    %v346 = vmax.f32 %v197, 1e-12
    %v347 = vrcp.pop %v346
    %v348 = vmul.f32 %v346, %v347
    %v349 = vsub.f32 1.0, %v348
    %v350 = vmul.f32 %v347, %v349
    %v351 = vadd.f32 %v347, %v350
    %vm352 = vweird.f32 %v346
    %vm353 = vweird.f32 %v347
    %vm354 = vmor %vm352, %vm353
    %v355 = vsel %vm354, %v347, %v351
    %v356 = vand.u32 2147483647, %v346
    %vm357 = vcmp.eq.f32.partialorder %v356, 8.507059e+37
    %v358 = vand.u32 %v346, 2147483648
    %v359 = vor.u32 1.1754944e-38, %v358
    %v360 = vsel %vm357, %v359, %v355
    %v361 = vmul.f32 1.0, %v360
    %v362 = vrsqrt.pop %v346
    %v363 = vmul.f32 %v362, %v346
    %v364 = vmul.f32 %v363, %v362
    %v365 = vmul.f32 0.5, %v364
    %v366 = vsub.f32 1.5, %v365
    %v367 = vmul.f32 %v362, %v366
    %v368 = vmul.f32 %v346, %v367
    %vm369 = vcmp.eq.f32.partialorder %v346, inf
    %v370 = vsel %vm369, %v346, %v368
    %vm371 = vcmp.eq.f32.partialorder %v346, 0.0
    %v372 = vand.u32 %v346, 2147483648
    %v373 = vsel %vm371, %v372, %v370
    %v374 = vmul.f32 %v373, %v361
    %v375 = vstv %s46
    %v376 = vmul.f32 %v373, %v375
    %v377 = vmul.f32 %v376, 1.442695
    %v378 = vpow.pop %v377
    %v379 = vmul.f32 %v361, %v378
    %v380 = vmul.f32 %v344, %v374
    %v381 = vld [vmem:[#allocation6 + $0x10] sm:$0x1]
    %v382 = vld [vmem:[#allocation6 + $0x11] sm:$0x1]
    %v383 = vld [vmem:[#allocation6 + $0x12] sm:$0x1]
    %v384 = vperm.slane %v383, 0
    %v385 = vmul.f32 %v380, %v384
    %v386 = vperm.slane %v382, 0
    %v387 = vadd.f32 %v386, %v385
    %v388 = vmul.f32 %v380, %v387
    %v389 = vperm.slane %v381, 0
    %v390 = vadd.f32 %v389, %v388
    %v391 = vmul.f32 %v390, %v379
    %392 = vst [vmem:[#allocation8] sm:$0xff] %v391
    // Predicated region
    $region22: #{tpu_custom_call.1} parent=1 // pred_check
      _
    $region23: #{tpu_custom_call.1} parent=1 // pred_check_branch
      %394 = sbr.rel (0) target = $region25
    $region24: #{tpu_custom_call.1} parent=1 // pred_region
      %396 = vsyncadd [#allocation5], 0
      %s398 = sshll.u32 [#allocation8], 4
      %s399 = int_to_ptr.vmem [resolvable:$true] %s398
      %s400 = sshll.u32 %s3, 4
      %s401 = int_to_ptr.hbm [resolvable:$true] %s400
      %403 = dma.vmem_to_hbm [thread:$0]  %s399, 128, %s401, [#allocation5]
    $region25: #{tpu_custom_call.1} parent=1 // pred_fallthru
      _
    // Predicated region
    $region26: #{tpu_custom_call.1} parent=1 // pred_check
      _
    $region27: #{tpu_custom_call.1} parent=1 // pred_check_branch
      %405 = sbr.rel (0) target = $region29
    $region28: #{tpu_custom_call.1} parent=1 // pred_region
      %407 = dma.done [#allocation5], 128
    $region29: #{tpu_custom_call.1} parent=1 // pred_fallthru
      _
    %408 = vsyncpa [#allocation4], 1
    %409 = vsyncpa [#allocation7], 1
    %410 = vsyncpa [#allocation5], 1

</llo_original>
